<compile_context>
chip_gen: v7x
topology: tpu7x:2x2x1
jax: 0.10.0
libtpu: 0.0.40
codegen_flags: <defaults>
</compile_context>

<pallas_src>
import functools

import jax
import jax.numpy as jnp
from jax.experimental import pallas as pl
from jax.experimental.pallas import tpu as pltpu

EPS = 1e-5
SLOPE = 0.2
C_IN, C1, C2, C3 = 6, 64, 128, 1024


def _leaky(x):
    # LeakyReLU(0.2) as mul+max (one fewer VALU op than compare+select).
    return jnp.maximum(x, SLOPE * x)


# ------------------------------ Pallas kernel ------------------------------ #
def _dgcnn_feature_kernel(
    h1_ref,            # (BB, CHUNK_ROWS, 64) bf16  post-conv1 activations
    w2_ref, t2_ref,    # conv2: (64, 128) bf16 (BN scale folded), (1, 128) f32 shift
    w3_ref,            # conv3: (128, 1024) bf16 (BN scale folded)
    out_ref,           # (BB, 1, 1024) f32 — running point-max of raw conv3 output
    *, k_pad, chunk_points,
):
    c = pl.program_id(1)

    @pl.when(c == 0)
    def _init():
        out_ref[...] = jnp.full(out_ref.shape, -jnp.inf, dtype=out_ref.dtype)

    bb, rows, _ = h1_ref.shape
    h = h1_ref[...].reshape(bb * rows, C1)                       # bf16

    # conv2 (1x1); BN scale already folded into the bf16 weights. f32 accumulate.
    h = jnp.dot(h, w2_ref[...], preferred_element_type=jnp.float32)

    # Neighbor-max over K first (PyTorch: x.max(dim=-1) on (B,C,N,K)). The
    # per-channel shift and the monotone LeakyReLU commute with the max, so the
    # VPU epilogue runs on the K-times-smaller tensor.
    h = jnp.max(h.reshape(bb * chunk_points, k_pad, C2), axis=1)
    h = _leaky(h + t2_ref[...])                                  # (bb*cp, 128) f32

    # conv3 (1d, kernel=1); BN scale folded into the bf16 weights.
    h = jnp.dot(h.astype(jnp.bfloat16), w3_ref[...],
                preferred_element_type=jnp.float32)              # (bb*cp, 1024) f32

    # Running max over the point dim N. The conv3 BN shift + LeakyReLU are
    # applied once on the pooled (B,1024) result in the wrapper (both commute
    # with the max), saving the full-width epilogue every grid step.
    h = jnp.max(h.reshape(bb, chunk_points, C3), axis=1)         # (bb, 1024)
    out_ref[...] = jnp.maximum(out_ref[...], h[:, None, :])


# --------------------------- tiling / device config ------------------------ #
def _device_config():
    """(target_rows, vmem_limit_bytes, allow_single_grid_step) per generation."""
    kind = ""
    try:
        kind = jax.devices()[0].device_kind.lower()
    except Exception:
        pass
    if "v7" in kind:
        # 64 MiB physical VMEM: keep blocks + double-buffering + f32 temps well
        # under ~48 MiB; keep >=2 grid steps so both TensorCores get work.
        return 12 * 1024, 48 * 1024 * 1024, False
    if ("v6" in kind) or ("v5e" in kind) or ("v5 lite" in kind) or ("v5lite" in kind):
        # Single TensorCore, 128 MiB physical VMEM: raise the scoped limit and
        # allow a single big grid step when everything fits.
        return 16 * 1024, 96 * 1024 * 1024, True
    # Unknown generation: conservative defaults.
    return 8 * 1024, 32 * 1024 * 1024, False


def _choose_point_tiling(n_points, k_pad, target_rows):
    """Return (chunk_points, n_chunks, n_points_padded).

    chunk_points*k_pad ~ target_rows; padding duplicates real points, which is
    max-invariant, so prime / divisor-poor N never degrades to tiny tiles."""
    cp_max = max(1, min(n_points, target_rows // k_pad))
    n_chunks = -(-n_points // cp_max)                 # ceil
    cp = -(-n_points // n_chunks)                     # ceil — minimal padding
    if cp >= 8:
        cp = -(-cp // 8) * 8                          # MXU-friendly post-max M
    return cp, n_chunks, n_chunks * cp


def _pick_batch_block(batch, chunk_rows, n_chunks, target_rows, allow_single_step):
    """Amortize several batch elements per grid step when per-step work is small.
    Keep >=2 grid steps on multi-TensorCore chips (v7x); single-TC chips may
    collapse to one step."""
    if n_chunks > 1 or batch <= 1:
        return 1
    best = 1
    for bb in range(1, batch + 1):
        if batch % bb == 0 and bb * chunk_rows <= target_rows:
            if allow_single_step or batch // bb >= 2:
                best = bb
    return best


# ------------------------------ forward passes ----------------------------- #
def dgcnn_pooled_features(x_nchw, params):
    """conv1..conv3 + both max reductions; returns pooled (B, 1024) f32."""
    (w1, s1, t1, w2, s2, t2, w3, s3, t3, *_rest) = params
    B, C, N, K = x_nchw.shape
    assert C == C_IN

    target_rows, vmem_limit, allow_single_step = _device_config()

    # conv1 (1x1, 6->64) + BN + LeakyReLU in the wrapper: a 6-wide contraction
    # wastes 122/128 MXU lanes and would inflate the streamed tensor ~21x, so
    # the kernel receives a lane-dense (., 64) bf16 activation instead.
    x = jnp.transpose(x_nchw, (0, 2, 3, 1))                      # (B, N, K, 6)
    h1 = _leaky(jnp.dot(x, w1, preferred_element_type=jnp.float32) * s1 + t1)

    # Pad neighbors to a multiple of 8 (sublane-aligned in-kernel reshape) and
    # points up to n_chunks*chunk_points. Both pads duplicate real rows, which
    # never changes a max.
    k_pad = ((K + 7) // 8) * 8
    cp, n_chunks, n_padded = _choose_point_tiling(N, k_pad, target_rows)
    if k_pad != K or n_padded != N:
        h1 = jnp.pad(h1, ((0, 0), (0, n_padded - N), (0, k_pad - K), (0, 0)),
                     mode="edge")
    h1 = h1.reshape(B, n_padded * k_pad, C1).astype(jnp.bfloat16)

    chunk_rows = cp * k_pad                                      # multiple of 8
    bb = _pick_batch_block(B, chunk_rows, n_chunks, target_rows,
                           allow_single_step)

    # Fold BN scales into the bf16 weights; only shift + LeakyReLU remain as
    # epilogues (applied after the max reductions — exact commutation).
    w2b = (w2 * s2).astype(jnp.bfloat16)
    w3b = (w3 * s3).astype(jnp.bfloat16)

    kernel = functools.partial(_dgcnn_feature_kernel, k_pad=k_pad,
                               chunk_points=cp)
    const = lambda b, c: (0, 0)
    pooled = pl.pallas_call(
        kernel,
        out_shape=jax.ShapeDtypeStruct((B, 1, C3), jnp.float32),
        grid_spec=pltpu.PrefetchScalarGridSpec(
            num_scalar_prefetch=0,
            grid=(B // bb, n_chunks),
            in_specs=[
                pl.BlockSpec((bb, chunk_rows, C1), lambda b, c: (b, c, 0)),
                pl.BlockSpec((C1, C2), const),
                pl.BlockSpec((1, C2), const),
                pl.BlockSpec((C2, C3), const),
            ],
            out_specs=pl.BlockSpec((bb, 1, C3), lambda b, c: (b, 0, 0)),
        ),
        compiler_params=pltpu.CompilerParams(
            dimension_semantics=("parallel", "arbitrary"),
            vmem_limit_bytes=vmem_limit),
    )(h1, w2b, t2, w3b)

    # conv3 BN shift + LeakyReLU, applied once after the point-max.
    return _leaky(pooled[:, 0, :] + t3)                          # (B, 1024)


def transform_net_forward(x_nchw, params):
    (w1, s1, t1, w2, s2, t2, w3, s3, t3,
     l1, s4, t4, l2, s5, t5, wt, bt) = params
    B = x_nchw.shape[0]
    pooled = dgcnn_pooled_features(x_nchw, params)               # (B, 1024) f32

    # M=1 MLP head hoisted out of the kernel: batched (M=B) matmuls in XLA.
    bf = jnp.bfloat16
    h = _leaky(jnp.dot(pooled.astype(bf), l1.astype(bf),
                       preferred_element_type=jnp.float32) * s4 + t4)   # (B,512)
    h = _leaky(jnp.dot(h.astype(bf), l2.astype(bf),
                       preferred_element_type=jnp.float32) * s5 + t5)   # (B,256)
    out = jnp.dot(h, wt, preferred_element_type=jnp.float32) + bt       # (B,9)
    return out.reshape(B, 3, 3)


# --------------------------------- params ---------------------------------- #
def init_params(key):
    keys = jax.random.split(key, 5)

    def bn_fold(c):
        gamma = jnp.ones((1, c), jnp.float32)
        beta = jnp.zeros((1, c), jnp.float32)
        mean = jnp.zeros((1, c), jnp.float32)
        var = jnp.ones((1, c), jnp.float32)
        scale = gamma / jnp.sqrt(var + EPS)
        shift = beta - mean * scale
        return scale, shift

    def uniform_init(k, fan_in, shape):
        bound = 1.0 / jnp.sqrt(jnp.float32(fan_in))
        return jax.random.uniform(k, shape, jnp.float32, -bound, bound)

    w1 = uniform_init(keys[0], 6, (6, 64))          # Conv2d(6, 64, 1), no bias
    w2 = uniform_init(keys[1], 64, (64, 128))       # Conv2d(64, 128, 1), no bias
    w3 = uniform_init(keys[2], 128, (128, 1024))    # Conv1d(128, 1024, 1), no bias
    l1 = uniform_init(keys[3], 1024, (1024, 512))   # Linear(1024, 512), no bias
    l2 = uniform_init(keys[4], 512, (512, 256))     # Linear(512, 256), no bias
    s1, t1 = bn_fold(64)
    s2, t2 = bn_fold(128)
    s3, t3 = bn_fold(1024)
    s4, t4 = bn_fold(512)
    s5, t5 = bn_fold(256)
    wt = jnp.zeros((256, 9), jnp.float32)               # transform.weight = 0
    bt = jnp.eye(3, dtype=jnp.float32).reshape(1, 9)    # transform.bias = I(3)
    return (w1, s1, t1, w2, s2, t2, w3, s3, t3,
            l1, s4, t4, l2, s5, t5, wt, bt)


# ------------------------------ pure-JAX reference -------------------------- #
def reference_pooled_features(x_nchw, params):
    """PyTorch op order (scale+shift+LeakyReLU before each max), same folded
    bf16 weights as the kernel."""
    (w1, s1, t1, w2, s2, t2, w3, s3, t3, *_rest) = params
    bf = jnp.bfloat16
    w2b = (w2 * s2).astype(bf)
    w3b = (w3 * s3).astype(bf)
    x = jnp.transpose(x_nchw, (0, 2, 3, 1))                     # (B, N, K, 6)
    h = _leaky(jnp.dot(x, w1, preferred_element_type=jnp.float32) * s1 + t1)
    h = _leaky(jnp.dot(h.astype(bf), w2b,
                       preferred_element_type=jnp.float32) + t2)
    h = h.max(axis=2)                                           # (B, N, 128)
    h = _leaky(jnp.dot(h.astype(bf), w3b,
                       preferred_element_type=jnp.float32) + t3)
    return h.max(axis=1)                                        # (B, 1024)


def reference_forward(x_nchw, params):
    (w1, s1, t1, w2, s2, t2, w3, s3, t3,
     l1, s4, t4, l2, s5, t5, wt, bt) = params
    B = x_nchw.shape[0]
    bf = jnp.bfloat16
    h = reference_pooled_features(x_nchw, params)
    h = _leaky(jnp.dot(h.astype(bf), l1.astype(bf),
                       preferred_element_type=jnp.float32) * s4 + t4)
    h = _leaky(jnp.dot(h.astype(bf), l2.astype(bf),
                       preferred_element_type=jnp.float32) * s5 + t5)
    out = jnp.dot(h, wt, preferred_element_type=jnp.float32) + bt
    return out.reshape(B, 3, 3)


if __name__ == "__main__":
    key = jax.random.PRNGKey(0)
    kx, kp = jax.random.split(key)
    B, N, K = 2, 16, 8
    x = jax.random.normal(kx, (B, 6, N, K), jnp.float32)        # NCHW, like PyTorch
    params = init_params(kp)

    out = jax.block_until_ready(jax.jit(transform_net_forward)(x, params))
    pooled = jax.block_until_ready(jax.jit(dgcnn_pooled_features)(x, params))

    ref_pooled = reference_pooled_features(x, params)
    ref_out = reference_forward(x, params)

    assert out.shape == (B, 3, 3)
    assert jnp.allclose(pooled, ref_pooled, atol=5e-3, rtol=5e-3), (pooled, ref_pooled)
    assert jnp.allclose(out, ref_out, atol=1e-4, rtol=1e-4), (out, ref_out)
    print("KERNEL_OK")
</pallas_src>

<mosaic_0001>
module attributes {stable_mosaic.version = 11 : i64} {
  func.func @_dgcnn_feature_kernel(%arg0: i32, %arg1: i32, %arg2: memref<1x128x64xbf16, #tpu.memory_space<vmem>>, %arg3: memref<64x128xbf16, #tpu.memory_space<vmem>>, %arg4: memref<1x128xf32, #tpu.memory_space<vmem>>, %arg5: memref<128x1024xbf16, #tpu.memory_space<vmem>>, %arg6: memref<1x1x1024xf32, #tpu.memory_space<vmem>>) attributes {dimension_semantics = [#tpu.dimension_semantics<parallel>, #tpu.dimension_semantics<arbitrary>], iteration_bounds = array<i64: 2, 1>, scalar_prefetch = 0 : i64, scratch_operands = 0 : i64, tpu.core_type = #tpu.core_type<tc>, window_params = [{transform_indices = @transform_0, window_bounds = array<i64: 1, 128, 64>}, {pipeline_mode = #tpu.pipeline_mode<synchronous>, transform_indices = @transform_1, window_bounds = array<i64: 64, 128>}, {pipeline_mode = #tpu.pipeline_mode<synchronous>, transform_indices = @transform_2, window_bounds = array<i64: 1, 128>}, {pipeline_mode = #tpu.pipeline_mode<synchronous>, transform_indices = @transform_3, window_bounds = array<i64: 128, 1024>}, {transform_indices = @transform_4, window_bounds = array<i64: 1, 1, 1024>}]} {
    %c0_i32 = arith.constant 0 : i32
    %0 = arith.cmpi eq, %arg1, %c0_i32 : i32
    %1 = arith.extui %0 : i1 to i32
    %c0_i32_0 = arith.constant 0 : i32
    %2 = arith.cmpi ne, %1, %c0_i32_0 : i32
    scf.if %2 {
      %cst_19 = arith.constant 0xFF800000 : f32
      %24 = vector.broadcast %cst_19 : f32 to vector<1x1x1024xf32>
      %c0_20 = arith.constant 0 : index
      %c0_21 = arith.constant 0 : index
      %c0_22 = arith.constant 0 : index
      %25 = vector.load %arg6[%c0_20, %c0_21, %c0_22] : memref<1x1x1024xf32, #tpu.memory_space<vmem>>, vector<1x1x1024xf32>
      tpu.vector_store %arg6[%c0_20, %c0_21, %c0_22], %24 {strides = array<i32>} : memref<1x1x1024xf32, #tpu.memory_space<vmem>>, vector<1x1x1024xf32>,
    } else {
    }
    %c0 = arith.constant 0 : index
    %c0_1 = arith.constant 0 : index
    %c0_2 = arith.constant 0 : index
    %3 = vector.load %arg2[%c0, %c0_1, %c0_2] : memref<1x128x64xbf16, #tpu.memory_space<vmem>>, vector<1x128x64xbf16>
    %4 = vector.shape_cast %3 : vector<1x128x64xbf16> to vector<128x64xbf16>
    %c0_3 = arith.constant 0 : index
    %c0_4 = arith.constant 0 : index
    %5 = vector.load %arg3[%c0_3, %c0_4] : memref<64x128xbf16, #tpu.memory_space<vmem>>, vector<64x128xbf16>
    %cst = arith.constant dense<0.000000e+00> : vector<128x128xf32>
    %6 = tpu.matmul %4, %5, %cst {dimension_numbers = #tpu.dot_dimension_numbers<[1], [0], [0], [1], [0, 0, 1, 1], [], []>} : vector<128x64xbf16>, vector<64x128xbf16>, vector<128x128xf32> -> vector<128x128xf32>
    %7 = vector.shape_cast %6 : vector<128x128xf32> to vector<16x8x128xf32>
    %cst_5 = arith.constant dense<0xFF800000> : vector<16x128xf32>
    %8 = vector.multi_reduction <maximumf>, %7, %cst_5 [1] : vector<16x8x128xf32> to vector<16x128xf32>
    %c0_6 = arith.constant 0 : index
    %c0_7 = arith.constant 0 : index
    %9 = vector.load %arg4[%c0_6, %c0_7] : memref<1x128xf32, #tpu.memory_space<vmem>>, vector<1x128xf32>
    %10 = vector.broadcast %9 : vector<1x128xf32> to vector<16x128xf32>
    %11 = arith.addf %8, %10 : vector<16x128xf32>
    %cst_8 = arith.constant 2.000000e-01 : f32
    %12 = vector.broadcast %cst_8 : f32 to vector<16x128xf32>
    %13 = arith.mulf %12, %11 : vector<16x128xf32>
    %14 = arith.maximumf %11, %13 : vector<16x128xf32>
    %15 = arith.truncf %14 : vector<16x128xf32> to vector<16x128xbf16>
    %c0_9 = arith.constant 0 : index
    %c0_10 = arith.constant 0 : index
    %16 = vector.load %arg5[%c0_9, %c0_10] : memref<128x1024xbf16, #tpu.memory_space<vmem>>, vector<128x1024xbf16>
    %cst_11 = arith.constant dense<0.000000e+00> : vector<16x1024xf32>
    %17 = tpu.matmul %15, %16, %cst_11 {dimension_numbers = #tpu.dot_dimension_numbers<[1], [0], [0], [1], [0, 0, 1, 1], [], []>} : vector<16x128xbf16>, vector<128x1024xbf16>, vector<16x1024xf32> -> vector<16x1024xf32>
    %18 = vector.shape_cast %17 : vector<16x1024xf32> to vector<1x16x1024xf32>
    %cst_12 = arith.constant dense<0xFF800000> : vector<1x1024xf32>
    %19 = vector.multi_reduction <maximumf>, %18, %cst_12 [1] : vector<1x16x1024xf32> to vector<1x1024xf32>
    %c0_13 = arith.constant 0 : index
    %c0_14 = arith.constant 0 : index
    %c0_15 = arith.constant 0 : index
    %20 = vector.load %arg6[%c0_13, %c0_14, %c0_15] : memref<1x1x1024xf32, #tpu.memory_space<vmem>>, vector<1x1x1024xf32>
    %21 = vector.shape_cast %19 : vector<1x1024xf32> to vector<1x1x1024xf32>
    %22 = arith.maximumf %20, %21 : vector<1x1x1024xf32>
    %c0_16 = arith.constant 0 : index
    %c0_17 = arith.constant 0 : index
    %c0_18 = arith.constant 0 : index
    %23 = vector.load %arg6[%c0_16, %c0_17, %c0_18] : memref<1x1x1024xf32, #tpu.memory_space<vmem>>, vector<1x1x1024xf32>
    tpu.vector_store %arg6[%c0_16, %c0_17, %c0_18], %22 {strides = array<i32>} : memref<1x1x1024xf32, #tpu.memory_space<vmem>>, vector<1x1x1024xf32>,
    return
  }
  func.func @transform_0(%arg0: i32, %arg1: i32) -> (i32, i32, i32) {
    %c0_i32 = arith.constant 0 : i32
    %c0_i32_0 = arith.constant 0 : i32
    return %arg0, %arg1, %c0_i32 : i32, i32, i32
  }
  func.func @transform_1(%arg0: i32, %arg1: i32) -> (i32, i32) {
    %c0_i32 = arith.constant 0 : i32
    %c0_i32_0 = arith.constant 0 : i32
    %c0_i32_1 = arith.constant 0 : i32
    return %c0_i32, %c0_i32_0 : i32, i32
  }
  func.func @transform_2(%arg0: i32, %arg1: i32) -> (i32, i32) {
    %c0_i32 = arith.constant 0 : i32
    %c0_i32_0 = arith.constant 0 : i32
    %c0_i32_1 = arith.constant 0 : i32
    return %c0_i32, %c0_i32_0 : i32, i32
  }
  func.func @transform_3(%arg0: i32, %arg1: i32) -> (i32, i32) {
    %c0_i32 = arith.constant 0 : i32
    %c0_i32_0 = arith.constant 0 : i32
    %c0_i32_1 = arith.constant 0 : i32
    return %c0_i32, %c0_i32_0 : i32, i32
  }
  func.func @transform_4(%arg0: i32, %arg1: i32) -> (i32, i32, i32) {
    %c0_i32 = arith.constant 0 : i32
    %c0_i32_0 = arith.constant 0 : i32
    %c0_i32_1 = arith.constant 0 : i32
    return %arg0, %c0_i32, %c0_i32_0 : i32, i32, i32
  }
}

</mosaic_0001>

<llo_original>
// kernel: transform_net_forward.1
$region0: #{transform_net_forward.1}
  #allocation0 [shape = 'u32[]', space=smem, size = 0x4, offset = 0x4, fixed_abs, tag = 'smem constant byte address 0x4 - core index']
  #allocation1 [shape = 'u32[144,128]{1,0:T(1,128)}', space=vmem, size = 0x12000, scoped, tag = 'internal scratch']
  %s0 = inlined_call_operand.vmem [shape: bf16[2,128,64], index: 0, kind: input, shape index: {}]
  %s1 = inlined_call_operand.vmem [shape: bf16[64,128], index: 1, kind: input, shape index: {}]
  %s2 = inlined_call_operand.hbm [shape: f32[1,128], index: 2, kind: input, shape index: {}]
  %s3 = inlined_call_operand.vmem [shape: bf16[128,1024], index: 3, kind: input, shape index: {}]
  %s4 = inlined_call_operand.vmem [shape: f32[2,1,1024], index: 4, kind: output, shape index: {}]
  %s5 = sld [smem:[#allocation0]]
  $region57: #{transform_net_forward.1} parent=0
    _
  %s7 = ssub.s32 1, %s5
  %s8 = scalar_select 0, %s7, %s5
  $region1: #{transform_net_forward.1} parent=0
    #allocation2 [shape = 'u8[512]{0}', space=vmem, size = 0x400, scoped, tag = 'input window, operand 2, single buffered']
    #allocation3 [shape = 's32[2]{0}', space=sflag, size = 0x8, scoped, tag = 'scoped memory for transform_net_forward.1']
    %9 = vsyncpa [#allocation3], 0
    loop: start=0, step=1, limit=4
    $region2: #{transform_net_forward.1} parent=1 // loop_pre_header
      _
    $region3: #{transform_net_forward.1} parent=1 // loop_header
      %s11 = sphi 0, %s15
      %p12 = scmp.ge.s32.totalorder %s11, 4
      %s18 = sphi 0, %s30
      %s19 = sphi 0, %s26
      %s20 = sphi 0, %s18
      %s21 = sphi 0, %s19
      %s22 = sphi 0, %s20
      %s23 = sphi 0, %s21
      %s35 = sphi 0, %s37
      %s38 = sphi 0, %s35
      %s39 = sphi 0, %s38
      %s55 = sphi 0, %s39
      %s59 = sphi 0, %s59
      %s61 = sphi 0, %s59
      %s62 = sphi 0, %s61
      %s76 = sphi 0, %s62
      %s80 = sphi 0, %s80
      %s82 = sphi 0, %s80
      %s83 = sphi 0, %s82
      %s97 = sphi 0, %s83
      %s101 = sphi 0, %s101
      %s103 = sphi 0, %s101
      %s104 = sphi 0, %s103
      %s118 = sphi 0, %s104
      %s124 = sphi 0, %s126
      %s127 = sphi 0, %s124
      %s128 = sphi 0, %s127
      %s144 = sphi 0, %s128
    $region4: #{transform_net_forward.1} parent=1 // loop_header_branch
      %14 = sbr.rel (%p12) target = $region8
    $region5: #{transform_net_forward.1} parent=1 // loop_body
      %s16 = ssub.s32 %s11, 1
      %s17 = ssub.s32 %s11, 2
      %s24 = sadd.s32 1, %s19
      %p25 = scmp.ge.s32.totalorder %s24, 1
      %s26 = scalar_select %p25, 0, %s24
      %s27 = sadd.s32 1, %s18
      %s28 = scalar_select %p25, %s27, %s18
      %p29 = scmp.ge.s32.totalorder %s28, 2
      %s30 = scalar_select %p29, 0, %s28
      %s31 = ssub.s32 %s18, %s30
      %s32 = ssub.s32 %s19, %s26
      %s33 = sor.u32 %s31, %s32
      %p34 = scmp.eq.s32.totalorder %s33, 0
      %s36 = sadd.s32 %s35, 1
      %s37 = scalar_select %p34, %s35, %s36
      %p40 = pneg %p34
      %p41 = scmp.eq.s32.totalorder %s11, 1
      %p42 = por %p40, %p41
      %p43 = scmp.ne.s32.totalorder %s35, %s38
      %p44 = scmp.eq.s32.totalorder %s11, 0
      %p45 = por %p43, %p44
      %p46 = scmp.ne.s32.totalorder %s35, %s38
      %p47 = scmp.eq.s32.totalorder %s16, 1
      %p48 = por %p46, %p47
      %p49 = scmp.ne.s32.totalorder %s38, %s39
      %p50 = scmp.eq.s32.totalorder %s16, 0
      %p51 = por %p49, %p50
      %p52 = scmp.ne.s32.totalorder %s38, %s39
      %p53 = scmp.eq.s32.totalorder %s17, 1
      %p54 = por %p52, %p53
      %p56 = scmp.ne.s32.totalorder %s39, %s55
      %p57 = scmp.eq.s32.totalorder %s17, 0
      %p58 = por %p56, %p57
      %s60 = sadd.s32 %s59, 1
      %p63 = scmp.eq.s32.totalorder %s11, 1
      %p64 = scmp.ne.s32.totalorder %s59, %s61
      %p65 = scmp.eq.s32.totalorder %s11, 0
      %p66 = por %p64, %p65
      %p67 = scmp.ne.s32.totalorder %s59, %s61
      %p68 = scmp.eq.s32.totalorder %s16, 1
      %p69 = por %p67, %p68
      %p70 = scmp.ne.s32.totalorder %s61, %s62
      %p71 = scmp.eq.s32.totalorder %s16, 0
      %p72 = por %p70, %p71
      %p73 = scmp.ne.s32.totalorder %s61, %s62
      %p74 = scmp.eq.s32.totalorder %s17, 1
      %p75 = por %p73, %p74
      %p77 = scmp.ne.s32.totalorder %s62, %s76
      %p78 = scmp.eq.s32.totalorder %s17, 0
      %p79 = por %p77, %p78
      %s81 = sadd.s32 %s80, 1
      %p84 = scmp.eq.s32.totalorder %s11, 1
      %p85 = scmp.ne.s32.totalorder %s80, %s82
      %p86 = scmp.eq.s32.totalorder %s11, 0
      %p87 = por %p85, %p86
      %p88 = scmp.ne.s32.totalorder %s80, %s82
      %p89 = scmp.eq.s32.totalorder %s16, 1
      %p90 = por %p88, %p89
      %p91 = scmp.ne.s32.totalorder %s82, %s83
      %p92 = scmp.eq.s32.totalorder %s16, 0
      %p93 = por %p91, %p92
      %p94 = scmp.ne.s32.totalorder %s82, %s83
      %p95 = scmp.eq.s32.totalorder %s17, 1
      %p96 = por %p94, %p95
      %p98 = scmp.ne.s32.totalorder %s83, %s97
      %p99 = scmp.eq.s32.totalorder %s17, 0
      %p100 = por %p98, %p99
      %s102 = sadd.s32 %s101, 1
      %p105 = scmp.eq.s32.totalorder %s11, 1
      %p106 = scmp.ne.s32.totalorder %s101, %s103
      %p107 = scmp.eq.s32.totalorder %s11, 0
      %p108 = por %p106, %p107
      %p109 = scmp.ne.s32.totalorder %s101, %s103
      %p110 = scmp.eq.s32.totalorder %s16, 1
      %p111 = por %p109, %p110
      %p112 = scmp.ne.s32.totalorder %s103, %s104
      %p113 = scmp.eq.s32.totalorder %s16, 0
      %p114 = por %p112, %p113
      %p115 = scmp.ne.s32.totalorder %s103, %s104
      %p116 = scmp.eq.s32.totalorder %s17, 1
      %p117 = por %p115, %p116
      %p119 = scmp.ne.s32.totalorder %s104, %s118
      %p120 = scmp.eq.s32.totalorder %s17, 0
      %p121 = por %p119, %p120
      %s122 = ssub.s32 %s18, %s30
      %p123 = scmp.eq.s32.totalorder %s122, 0
      %s125 = sadd.s32 %s124, 1
      %s126 = scalar_select %p123, %s124, %s125
      %p129 = pneg %p123
      %p130 = scmp.eq.s32.totalorder %s11, 1
      %p131 = por %p129, %p130
      %p132 = scmp.ne.s32.totalorder %s124, %s127
      %p133 = scmp.eq.s32.totalorder %s11, 0
      %p134 = por %p132, %p133
      %p135 = scmp.ne.s32.totalorder %s124, %s127
      %p136 = scmp.eq.s32.totalorder %s16, 1
      %p137 = por %p135, %p136
      %p138 = scmp.ne.s32.totalorder %s127, %s128
      %p139 = scmp.eq.s32.totalorder %s16, 0
      %p140 = por %p138, %p139
      %p141 = scmp.ne.s32.totalorder %s127, %s128
      %p142 = scmp.eq.s32.totalorder %s17, 1
      %p143 = por %p141, %p142
      %p145 = scmp.ne.s32.totalorder %s128, %s144
      %p146 = scmp.eq.s32.totalorder %s17, 0
      %p147 = por %p145, %p146
      %p148 = scmp.le.s32.totalorder 1, %s11
      %p149 = scmp.lt.s32.totalorder %s11, 3
      %p150 = pnand %p148, %p149
      %p151 = pneg %p150
      // Predicated region
      $region9: #{transform_net_forward.1} parent=5 // pred_check
        _
      $region10: #{transform_net_forward.1} parent=5 // pred_check_branch
        %153 = sbr.rel (%p150) target = $region12
      $region11: #{transform_net_forward.1} parent=5 // pred_region
        %s154 = ssub.s32 %s11, 1
        // Predicated region
        $region13: #{transform_net_forward.1} parent=11 // pred_check
          %p155 = pneg %p72
        $region14: #{transform_net_forward.1} parent=11 // pred_check_branch
          %157 = sbr.rel (%p155) target = $region16
        $region15: #{transform_net_forward.1} parent=11 // pred_region
          _
        $region16: #{transform_net_forward.1} parent=11 // pred_fallthru
          _
        // Predicated region
        $region17: #{transform_net_forward.1} parent=11 // pred_check
          %p158 = pneg %p93
        $region18: #{transform_net_forward.1} parent=11 // pred_check_branch
          %160 = sbr.rel (%p158) target = $region20
        $region19: #{transform_net_forward.1} parent=11 // pred_region
          %s162 = ssub.s32 16, 16
          %163 = vsyncadd [#allocation3], %s162
          %s165 = sshll.u32 [#allocation2], 4
          %s166 = int_to_ptr.vmem [resolvable:$true] %s165
          %168 = dma.hbm_to_vmem [thread:$0]  %s2, 16, %s166, [#allocation3]
        $region20: #{transform_net_forward.1} parent=11 // pred_fallthru
          _
        // Predicated region
        $region21: #{transform_net_forward.1} parent=11 // pred_check
          %p169 = pneg %p114
        $region22: #{transform_net_forward.1} parent=11 // pred_check_branch
          %171 = sbr.rel (%p169) target = $region24
        $region23: #{transform_net_forward.1} parent=11 // pred_region
          _
        $region24: #{transform_net_forward.1} parent=11 // pred_fallthru
          _
      $region12: #{transform_net_forward.1} parent=5 // pred_fallthru
        _
      %p172 = scmp.lt.s32.totalorder %s11, 2
      // Predicated region
      $region25: #{transform_net_forward.1} parent=5 // pred_check
        %p173 = pneg %p172
      $region26: #{transform_net_forward.1} parent=5 // pred_check_branch
        %175 = sbr.rel (%p173) target = $region28
      $region27: #{transform_net_forward.1} parent=5 // pred_region
        // Predicated region
        $region29: #{transform_net_forward.1} parent=27 // pred_check
          %p176 = pneg %p45
        $region30: #{transform_net_forward.1} parent=27 // pred_check_branch
          %178 = sbr.rel (%p176) target = $region32
        $region31: #{transform_net_forward.1} parent=27 // pred_region
          %s179 = smul.u32 16, %s19
          %p180 = scmp.lt.s32.totalorder %s18, 1
          %s181 = scalar_select %p180, %s18, 1
          %p182 = scmp.lt.s32.totalorder %s179, 15
          %s183 = scalar_select %p182, %s179, 15
          %s184 = smul.addr %s181, 16
          %s185 = sadd.s32 %s183, %s184
          %s186 = smul.addr %s185, 4
          %s187 = scalar_lea.vmem %s0, %s186
          %s188 = smul.u32 16, %s19
        $region32: #{transform_net_forward.1} parent=27 // pred_fallthru
          _
      $region28: #{transform_net_forward.1} parent=5 // pred_fallthru
        _
      %p189 = scmp.le.s32.totalorder 1, %s11
      %p190 = scmp.lt.s32.totalorder %s11, 3
      %p191 = pnand %p189, %p190
      %p192 = pneg %p191
      // Predicated region
      $region33: #{transform_net_forward.1} parent=5 // pred_check
        _
      $region34: #{transform_net_forward.1} parent=5 // pred_check_branch
        %194 = sbr.rel (%p191) target = $region36
      $region35: #{transform_net_forward.1} parent=5 // pred_region
        %s195 = ssub.s32 %s11, 1
        // Predicated region
        $region37: #{transform_net_forward.1} parent=35 // pred_check
          %p196 = pneg %p93
        $region38: #{transform_net_forward.1} parent=35 // pred_check_branch
          %198 = sbr.rel (%p196) target = $region40
        $region39: #{transform_net_forward.1} parent=35 // pred_region
          %199 = dma.done [#allocation3], 16
        $region40: #{transform_net_forward.1} parent=35 // pred_fallthru
          _
        %s200 = smul.u32 16, %s21
        %p201 = scmp.lt.s32.totalorder %s20, 1
        %s202 = scalar_select %p201, %s20, 1
        %p203 = scmp.lt.s32.totalorder %s200, 15
        %s204 = scalar_select %p203, %s200, 15
        %s205 = smul.addr %s202, 16
        %s206 = sadd.s32 %s204, %s205
        %s207 = smul.addr %s206, 4
        %s208 = scalar_lea.vmem %s0, %s207
        %p209 = pneg %p51
        %p210 = pneg %p48
        %p211 = pneg %p72
        %p212 = pneg %p69
        %p213 = pneg %p93
        %p214 = pneg %p90
        %p215 = pneg %p114
        %p216 = pneg %p111
        %p217 = pneg %p140
        %p218 = pneg %p137
        %p219 = scmp.lt.s32.totalorder %s20, 1
        %s220 = scalar_select %p219, %s20, 1
        %s221 = smul.addr %s220, 8
        %s222 = scalar_lea.vmem %s4, %s221
        %s223 = smul.u32 16, %s21
        %p224 = scmp.lt.s32.totalorder %s20, 1
        %s225 = scalar_select %p224, %s20, 1
        %p226 = scmp.lt.s32.totalorder %s223, 15
        %s227 = scalar_select %p226, %s223, 15
        %s228 = smul.addr %s225, 16
        %s229 = sadd.s32 %s227, %s228
        %s230 = smul.addr %s229, 4
        %s231 = scalar_lea.vmem %s0, %s230
        %s232 = smul.u32 16, %s21
        %p233 = scmp.lt.s32.totalorder %s20, 1
        %s234 = scalar_select %p233, %s20, 1
        %s235 = smul.addr %s234, 8
        %s236 = scalar_lea.vmem %s4, %s235
        %p238 = scmp.eq.s32.totalorder %s21, 0
        // Predicated region
        $region41: #{transform_net_forward.1} parent=35 // pred_check
          %p239 = pneg %p238
        $region42: #{transform_net_forward.1} parent=35 // pred_check_branch
          %241 = sbr.rel (%p239) target = $region44
        $region43: #{transform_net_forward.1} parent=35 // pred_region
          %242 = vst [vmem:[%s236] sm:$0xff] -inf
        $region44: #{transform_net_forward.1} parent=35 // pred_fallthru
          _
        %v243 = vld [vmem:[%s231] sm:$0xf]
        %v244 = vld [vmem:[%s231 + $0x4] sm:$0xf]
        %v245 = vld [vmem:[%s231 + $0x8] sm:$0xf]
        %v246 = vld [vmem:[%s231 + $0xc] sm:$0xf]
        %v247 = vld [vmem:[%s231 + $0x10] sm:$0xf]
        %v248 = vld [vmem:[%s231 + $0x14] sm:$0xf]
        %v249 = vld [vmem:[%s231 + $0x18] sm:$0xf]
        %v250 = vld [vmem:[%s231 + $0x1c] sm:$0xf]
        %v251 = vld [vmem:[%s231 + $0x20] sm:$0xf]
        %v252 = vld [vmem:[%s231 + $0x24] sm:$0xf]
        %v253 = vld [vmem:[%s231 + $0x28] sm:$0xf]
        %v254 = vld [vmem:[%s231 + $0x2c] sm:$0xf]
        %v255 = vld [vmem:[%s231 + $0x30] sm:$0xf]
        %v256 = vld [vmem:[%s231 + $0x34] sm:$0xf]
        %v257 = vld [vmem:[%s231 + $0x38] sm:$0xf]
        %v258 = vld [vmem:[%s231 + $0x3c] sm:$0xf]
        %v259 = vld [vmem:[%s1] sm:$0xf]
        %v260 = vld [vmem:[%s1 + $0x4] sm:$0xf]
        %v261 = vld [vmem:[%s1 + $0x8] sm:$0xf]
        %v262 = vld [vmem:[%s1 + $0xc] sm:$0xf]
        %v263 = vld [vmem:[%s1 + $0x10] sm:$0xf]
        %v264 = vld [vmem:[%s1 + $0x14] sm:$0xf]
        %v265 = vld [vmem:[%s1 + $0x18] sm:$0xf]
        %v266 = vld [vmem:[%s1 + $0x1c] sm:$0xf]
        %v283 = vunpack.c.l.b16 %v243
        %v284 = vunpack.c.l.b16 %v244
        %v285 = vunpack.c.l.b16 %v245
        %v286 = vunpack.c.l.b16 %v246
        %v287 = vunpack.c.l.b16 %v247
        %v288 = vunpack.c.l.b16 %v248
        %v289 = vunpack.c.l.b16 %v249
        %v290 = vunpack.c.l.b16 %v250
        %v291 = vunpack.c.l.b16 %v251
        %v292 = vunpack.c.l.b16 %v252
        %v293 = vunpack.c.l.b16 %v253
        %v294 = vunpack.c.l.b16 %v254
        %v295 = vunpack.c.l.b16 %v255
        %v296 = vunpack.c.l.b16 %v256
        %v297 = vunpack.c.l.b16 %v257
        %v298 = vunpack.c.l.b16 %v258
        %v299 = vpack.c.b16 %v284, %v283
        %v300 = vpack.c.b16 %v286, %v285
        %v301 = vpack.c.b16 %v288, %v287
        %v302 = vpack.c.b16 %v290, %v289
        %v303 = vpack.c.b16 %v292, %v291
        %v304 = vpack.c.b16 %v294, %v293
        %v305 = vpack.c.b16 %v296, %v295
        %v306 = vpack.c.b16 %v298, %v297
        %v315 = vunpack.c.l.b16 %v259
        %v316 = vunpack.c.l.b16 %v260
        %v317 = vunpack.c.l.b16 %v261
        %v318 = vunpack.c.l.b16 %v262
        %v319 = vunpack.c.l.b16 %v263
        %v320 = vunpack.c.l.b16 %v264
        %v321 = vunpack.c.l.b16 %v265
        %v322 = vunpack.c.l.b16 %v266
        %v323 = vpack.c.b16 %v316, %v315
        %v324 = vpack.c.b16 %v318, %v317
        %v325 = vpack.c.b16 %v320, %v319
        %v326 = vpack.c.b16 %v322, %v321
        %vm331 = vcmask 523264
        %v333 = vsel %vm331, %v299, 0
        %v336 = vsel %vm331, %v300, 0
        %v339 = vsel %vm331, %v301, 0
        %v342 = vsel %vm331, %v302, 0
        %v345 = vsel %vm331, %v303, 0
        %v348 = vsel %vm331, %v304, 0
        %v351 = vsel %vm331, %v305, 0
        %v354 = vsel %vm331, %v306, 0
        %356 = vmatprep.subr.bf16.mxu0 0
        %357 = vmatpush1.bf16.msra.mxu0 %v323
        %358 = vmatprep.subr.bf16.mxu0 0
        %359 = vmatpush1.bf16.msra.mxu0 %v324
        %360 = vmatprep.subr.bf16.mxu0 0
        %361 = vmatpush1.bf16.msra.mxu0 %v325
        %362 = vmatprep.subr.bf16.mxu0 0
        %363 = vmatpush1.bf16.msra.mxu0 %v326
        %364 = vmatprep.subr.bf16.mxu0 0
        %365 = vmatpush1.bf16.msra.mxu0 0
        %366 = vmatprep.subr.bf16.mxu0 0
        %367 = vmatpush1.bf16.msra.mxu0 0
        %368 = vmatprep.subr.bf16.mxu0 0
        %369 = vmatpush1.bf16.msra.mxu0 0
        %370 = vmatprep.subr.bf16.mxu0 0
        %371 = vmatpush1.bf16.msra.mxu0 0
        %372 = vmatprep.subr.bf16.mxu0 0
        %373 = vmatpush1.bf16.msra.mxu0 0
        %374 = vmatprep.subr.bf16.mxu0 0
        %375 = vmatpush1.bf16.msra.mxu0 0
        %376 = vmatprep.subr.bf16.mxu0 0
        %377 = vmatpush1.bf16.msra.mxu0 0
        %378 = vmatprep.subr.bf16.mxu0 0
        %379 = vmatpush1.bf16.msra.mxu0 0
        %380 = vmatprep.subr.bf16.mxu0 0
        %381 = vmatpush1.bf16.msra.mxu0 0
        %382 = vmatprep.subr.bf16.mxu0 0
        %383 = vmatpush1.bf16.msra.mxu0 0
        %384 = vmatprep.subr.bf16.mxu0 0
        %385 = vmatpush1.bf16.msra.mxu0 0
        %386 = vmatprep.subr.bf16.mxu0 0
        %387 = vmatpush1.bf16.msra.mxu0 0
        %388 = vmatprep.mubr.bf16.mxu0 0
        %389 = vmatmul.mubr.bf16.gmra.mrb[0].mxu0 %v333
        %v390 = vpop.f32.mrb[0].mxu0
        %v391 = vadd.f32 0.0, %v390
        %v392 = vpop.f32.mrb[0].mxu0
        %v393 = vpop.f32.mrb[0].mxu0
        %v394 = vadd.f32 0.0, %v393
        %v395 = vpop.f32.mrb[0].mxu0
        %396 = vmatprep.mubr.bf16.mxu0 0
        %397 = vmatmul.mubr.bf16.gmra.mrb[0].mxu0 %v336
        %v398 = vpop.f32.mrb[0].mxu0
        %v399 = vadd.f32 0.0, %v398
        %v400 = vpop.f32.mrb[0].mxu0
        %v401 = vpop.f32.mrb[0].mxu0
        %v402 = vadd.f32 0.0, %v401
        %v403 = vpop.f32.mrb[0].mxu0
        %404 = vmatprep.mubr.bf16.mxu0 0
        %405 = vmatmul.mubr.bf16.gmra.mrb[0].mxu0 %v339
        %v406 = vpop.f32.mrb[0].mxu0
        %v407 = vadd.f32 0.0, %v406
        %v408 = vpop.f32.mrb[0].mxu0
        %v409 = vpop.f32.mrb[0].mxu0
        %v410 = vadd.f32 0.0, %v409
        %v411 = vpop.f32.mrb[0].mxu0
        %412 = vmatprep.mubr.bf16.mxu0 0
        %413 = vmatmul.mubr.bf16.gmra.mrb[0].mxu0 %v342
        %v414 = vpop.f32.mrb[0].mxu0
        %v415 = vadd.f32 0.0, %v414
        %v416 = vpop.f32.mrb[0].mxu0
        %v417 = vpop.f32.mrb[0].mxu0
        %v418 = vadd.f32 0.0, %v417
        %v419 = vpop.f32.mrb[0].mxu0
        %420 = vmatprep.mubr.bf16.mxu0 0
        %421 = vmatmul.mubr.bf16.gmra.mrb[0].mxu0 %v345
        %v422 = vpop.f32.mrb[0].mxu0
        %v423 = vadd.f32 0.0, %v422
        %v424 = vpop.f32.mrb[0].mxu0
        %v425 = vpop.f32.mrb[0].mxu0
        %v426 = vadd.f32 0.0, %v425
        %v427 = vpop.f32.mrb[0].mxu0
        %428 = vmatprep.mubr.bf16.mxu0 0
        %429 = vmatmul.mubr.bf16.gmra.mrb[0].mxu0 %v348
        %v430 = vpop.f32.mrb[0].mxu0
        %v431 = vadd.f32 0.0, %v430
        %v432 = vpop.f32.mrb[0].mxu0
        %v433 = vpop.f32.mrb[0].mxu0
        %v434 = vadd.f32 0.0, %v433
        %v435 = vpop.f32.mrb[0].mxu0
        %436 = vmatprep.mubr.bf16.mxu0 0
        %437 = vmatmul.mubr.bf16.gmra.mrb[0].mxu0 %v351
        %v438 = vpop.f32.mrb[0].mxu0
        %v439 = vadd.f32 0.0, %v438
        %v440 = vpop.f32.mrb[0].mxu0
        %v441 = vpop.f32.mrb[0].mxu0
        %v442 = vadd.f32 0.0, %v441
        %v443 = vpop.f32.mrb[0].mxu0
        %444 = vmatprep.mubr.bf16.mxu0 0
        %445 = vmatmul.mubr.bf16.gmra.mrb[0].mxu0 %v354
        %v446 = vpop.f32.mrb[0].mxu0
        %v447 = vadd.f32 0.0, %v446
        %v448 = vpop.f32.mrb[0].mxu0
        %v449 = vpop.f32.mrb[0].mxu0
        %v450 = vadd.f32 0.0, %v449
        %v451 = vpop.f32.mrb[0].mxu0
        %452 = vdwg.mxu0
        %v453 = vrot.slane %v391, 4
        %v454 = vmax.f32 %v391, %v453
        %v455 = vrot.slane %v454, 2
        %v456 = vmax.f32 %v454, %v455
        %v457 = vrot.slane %v456, 1
        %v458 = vmax.f32 %v456, %v457
        %v459 = vrot.slane %v394, 4
        %v460 = vmax.f32 %v394, %v459
        %v461 = vrot.slane %v460, 2
        %v462 = vmax.f32 %v460, %v461
        %v463 = vrot.slane %v462, 1
        %v464 = vmax.f32 %v462, %v463
        %v465 = vrot.slane %v399, 4
        %v466 = vmax.f32 %v399, %v465
        %v467 = vrot.slane %v466, 2
        %v468 = vmax.f32 %v466, %v467
        %v469 = vrot.slane %v468, 1
        %v470 = vmax.f32 %v468, %v469
        %v471 = vrot.slane %v402, 4
        %v472 = vmax.f32 %v402, %v471
        %v473 = vrot.slane %v472, 2
        %v474 = vmax.f32 %v472, %v473
        %v475 = vrot.slane %v474, 1
        %v476 = vmax.f32 %v474, %v475
        %v477 = vrot.slane %v407, 4
        %v478 = vmax.f32 %v407, %v477
        %v479 = vrot.slane %v478, 2
        %v480 = vmax.f32 %v478, %v479
        %v481 = vrot.slane %v480, 1
        %v482 = vmax.f32 %v480, %v481
        %v483 = vrot.slane %v410, 4
        %v484 = vmax.f32 %v410, %v483
        %v485 = vrot.slane %v484, 2
        %v486 = vmax.f32 %v484, %v485
        %v487 = vrot.slane %v486, 1
        %v488 = vmax.f32 %v486, %v487
        %v489 = vrot.slane %v415, 4
        %v490 = vmax.f32 %v415, %v489
        %v491 = vrot.slane %v490, 2
        %v492 = vmax.f32 %v490, %v491
        %v493 = vrot.slane %v492, 1
        %v494 = vmax.f32 %v492, %v493
        %v495 = vrot.slane %v418, 4
        %v496 = vmax.f32 %v418, %v495
        %v497 = vrot.slane %v496, 2
        %v498 = vmax.f32 %v496, %v497
        %v499 = vrot.slane %v498, 1
        %v500 = vmax.f32 %v498, %v499
        %v501 = vrot.slane %v423, 4
        %v502 = vmax.f32 %v423, %v501
        %v503 = vrot.slane %v502, 2
        %v504 = vmax.f32 %v502, %v503
        %v505 = vrot.slane %v504, 1
        %v506 = vmax.f32 %v504, %v505
        %v507 = vrot.slane %v426, 4
        %v508 = vmax.f32 %v426, %v507
        %v509 = vrot.slane %v508, 2
        %v510 = vmax.f32 %v508, %v509
        %v511 = vrot.slane %v510, 1
        %v512 = vmax.f32 %v510, %v511
        %v513 = vrot.slane %v431, 4
        %v514 = vmax.f32 %v431, %v513
        %v515 = vrot.slane %v514, 2
        %v516 = vmax.f32 %v514, %v515
        %v517 = vrot.slane %v516, 1
        %v518 = vmax.f32 %v516, %v517
        %v519 = vrot.slane %v434, 4
        %v520 = vmax.f32 %v434, %v519
        %v521 = vrot.slane %v520, 2
        %v522 = vmax.f32 %v520, %v521
        %v523 = vrot.slane %v522, 1
        %v524 = vmax.f32 %v522, %v523
        %v525 = vrot.slane %v439, 4
        %v526 = vmax.f32 %v439, %v525
        %v527 = vrot.slane %v526, 2
        %v528 = vmax.f32 %v526, %v527
        %v529 = vrot.slane %v528, 1
        %v530 = vmax.f32 %v528, %v529
        %v531 = vrot.slane %v442, 4
        %v532 = vmax.f32 %v442, %v531
        %v533 = vrot.slane %v532, 2
        %v534 = vmax.f32 %v532, %v533
        %v535 = vrot.slane %v534, 1
        %v536 = vmax.f32 %v534, %v535
        %v537 = vrot.slane %v447, 4
        %v538 = vmax.f32 %v447, %v537
        %v539 = vrot.slane %v538, 2
        %v540 = vmax.f32 %v538, %v539
        %v541 = vrot.slane %v540, 1
        %v542 = vmax.f32 %v540, %v541
        %v543 = vrot.slane %v450, 4
        %v544 = vmax.f32 %v450, %v543
        %v545 = vrot.slane %v544, 2
        %v546 = vmax.f32 %v544, %v545
        %v547 = vrot.slane %v546, 1
        %v548 = vmax.f32 %v546, %v547
        %v549 = vld [vmem:[#allocation2] sm:$0x1]
        %v551 = vlaneseq
        %v552 = vshrl.u32 %v551, 7
        %v553 = vsub.s32 0, %v552
        %v554 = vrot.slane %v549, %v553
        %v556 = vadd.f32 %v458, %v554
        %v557 = vadd.f32 %v464, %v554
        %v558 = vadd.f32 %v470, %v554
        %v559 = vadd.f32 %v476, %v554
        %v560 = vadd.f32 %v482, %v554
        %v561 = vadd.f32 %v488, %v554
        %v562 = vadd.f32 %v494, %v554
        %v563 = vadd.f32 %v500, %v554
        %v564 = vadd.f32 %v506, %v554
        %v565 = vadd.f32 %v512, %v554
        %v566 = vadd.f32 %v518, %v554
        %v567 = vadd.f32 %v524, %v554
        %v568 = vadd.f32 %v530, %v554
        %v569 = vadd.f32 %v536, %v554
        %v570 = vadd.f32 %v542, %v554
        %v571 = vadd.f32 %v548, %v554
        %v572 = vmul.f32 %v556, 0.2
        %v573 = vmul.f32 %v557, 0.2
        %v574 = vmul.f32 %v558, 0.2
        %v575 = vmul.f32 %v559, 0.2
        %v576 = vmul.f32 %v560, 0.2
        %v577 = vmul.f32 %v561, 0.2
        %v578 = vmul.f32 %v562, 0.2
        %v579 = vmul.f32 %v563, 0.2
        %v580 = vmul.f32 %v564, 0.2
        %v581 = vmul.f32 %v565, 0.2
        %v582 = vmul.f32 %v566, 0.2
        %v583 = vmul.f32 %v567, 0.2
        %v584 = vmul.f32 %v568, 0.2
        %v585 = vmul.f32 %v569, 0.2
        %v586 = vmul.f32 %v570, 0.2
        %v587 = vmul.f32 %v571, 0.2
        %v588 = vmax.f32 %v556, %v572
        %v589 = vmax.f32 %v557, %v573
        %v590 = vmax.f32 %v558, %v574
        %v591 = vmax.f32 %v559, %v575
        %v592 = vmax.f32 %v560, %v576
        %v593 = vmax.f32 %v561, %v577
        %v594 = vmax.f32 %v562, %v578
        %v595 = vmax.f32 %v563, %v579
        %v596 = vmax.f32 %v564, %v580
        %v597 = vmax.f32 %v565, %v581
        %v598 = vmax.f32 %v566, %v582
        %v599 = vmax.f32 %v567, %v583
        %v600 = vmax.f32 %v568, %v584
        %v601 = vmax.f32 %v569, %v585
        %v602 = vmax.f32 %v570, %v586
        %v603 = vmax.f32 %v571, %v587
        %v604 = vpack.c.bf16 %v588, %v588
        %v605 = vpack.c.bf16 %v589, %v589
        %v606 = vpack.c.bf16 %v590, %v590
        %v607 = vpack.c.bf16 %v591, %v591
        %v608 = vpack.c.bf16 %v592, %v592
        %v609 = vpack.c.bf16 %v593, %v593
        %v610 = vpack.c.bf16 %v594, %v594
        %v611 = vpack.c.bf16 %v595, %v595
        %v612 = vpack.c.bf16 %v596, %v596
        %v613 = vpack.c.bf16 %v597, %v597
        %v614 = vpack.c.bf16 %v598, %v598
        %v615 = vpack.c.bf16 %v599, %v599
        %v616 = vpack.c.bf16 %v600, %v600
        %v617 = vpack.c.bf16 %v601, %v601
        %v618 = vpack.c.bf16 %v602, %v602
        %v619 = vpack.c.bf16 %v603, %v603
        %v620 = vld [vmem:[%s3] sm:$0xff]
        %v621 = vld [vmem:[%s3 + $0x8] sm:$0xff]
        %v622 = vld [vmem:[%s3 + $0x10] sm:$0xff]
        %v623 = vld [vmem:[%s3 + $0x18] sm:$0xff]
        %v624 = vld [vmem:[%s3 + $0x20] sm:$0xff]
        %v625 = vld [vmem:[%s3 + $0x28] sm:$0xff]
        %v626 = vld [vmem:[%s3 + $0x30] sm:$0xff]
        %v627 = vld [vmem:[%s3 + $0x38] sm:$0xff]
        %v628 = vld [vmem:[%s3 + $0x40] sm:$0xff]
        %v629 = vld [vmem:[%s3 + $0x48] sm:$0xff]
        %v630 = vld [vmem:[%s3 + $0x50] sm:$0xff]
        %v631 = vld [vmem:[%s3 + $0x58] sm:$0xff]
        %v632 = vld [vmem:[%s3 + $0x60] sm:$0xff]
        %v633 = vld [vmem:[%s3 + $0x68] sm:$0xff]
        %v634 = vld [vmem:[%s3 + $0x70] sm:$0xff]
        %v635 = vld [vmem:[%s3 + $0x78] sm:$0xff]
        %v636 = vld [vmem:[%s3 + $0x80] sm:$0xff]
        %v637 = vld [vmem:[%s3 + $0x88] sm:$0xff]
        %v638 = vld [vmem:[%s3 + $0x90] sm:$0xff]
        %v639 = vld [vmem:[%s3 + $0x98] sm:$0xff]
        %v640 = vld [vmem:[%s3 + $0xa0] sm:$0xff]
        %v641 = vld [vmem:[%s3 + $0xa8] sm:$0xff]
        %v642 = vld [vmem:[%s3 + $0xb0] sm:$0xff]
        %v643 = vld [vmem:[%s3 + $0xb8] sm:$0xff]
        %v644 = vld [vmem:[%s3 + $0xc0] sm:$0xff]
        %v645 = vld [vmem:[%s3 + $0xc8] sm:$0xff]
        %v646 = vld [vmem:[%s3 + $0xd0] sm:$0xff]
        %v647 = vld [vmem:[%s3 + $0xd8] sm:$0xff]
        %v648 = vld [vmem:[%s3 + $0xe0] sm:$0xff]
        %v649 = vld [vmem:[%s3 + $0xe8] sm:$0xff]
        %v650 = vld [vmem:[%s3 + $0xf0] sm:$0xff]
        %v651 = vld [vmem:[%s3 + $0xf8] sm:$0xff]
        %v652 = vld [vmem:[%s3 + $0x100] sm:$0xff]
        %v653 = vld [vmem:[%s3 + $0x108] sm:$0xff]
        %v654 = vld [vmem:[%s3 + $0x110] sm:$0xff]
        %v655 = vld [vmem:[%s3 + $0x118] sm:$0xff]
        %v656 = vld [vmem:[%s3 + $0x120] sm:$0xff]
        %v657 = vld [vmem:[%s3 + $0x128] sm:$0xff]
        %v658 = vld [vmem:[%s3 + $0x130] sm:$0xff]
        %v659 = vld [vmem:[%s3 + $0x138] sm:$0xff]
        %v660 = vld [vmem:[%s3 + $0x140] sm:$0xff]
        %v661 = vld [vmem:[%s3 + $0x148] sm:$0xff]
        %v662 = vld [vmem:[%s3 + $0x150] sm:$0xff]
        %v663 = vld [vmem:[%s3 + $0x158] sm:$0xff]
        %v664 = vld [vmem:[%s3 + $0x160] sm:$0xff]
        %v665 = vld [vmem:[%s3 + $0x168] sm:$0xff]
        %v666 = vld [vmem:[%s3 + $0x170] sm:$0xff]
        %v667 = vld [vmem:[%s3 + $0x178] sm:$0xff]
        %v668 = vld [vmem:[%s3 + $0x180] sm:$0xff]
        %v669 = vld [vmem:[%s3 + $0x188] sm:$0xff]
        %v670 = vld [vmem:[%s3 + $0x190] sm:$0xff]
        %v671 = vld [vmem:[%s3 + $0x198] sm:$0xff]
        %v672 = vld [vmem:[%s3 + $0x1a0] sm:$0xff]
        %v673 = vld [vmem:[%s3 + $0x1a8] sm:$0xff]
        %v674 = vld [vmem:[%s3 + $0x1b0] sm:$0xff]
        %v675 = vld [vmem:[%s3 + $0x1b8] sm:$0xff]
        %v676 = vld [vmem:[%s3 + $0x1c0] sm:$0xff]
        %v677 = vld [vmem:[%s3 + $0x1c8] sm:$0xff]
        %v678 = vld [vmem:[%s3 + $0x1d0] sm:$0xff]
        %v679 = vld [vmem:[%s3 + $0x1d8] sm:$0xff]
        %v680 = vld [vmem:[%s3 + $0x1e0] sm:$0xff]
        %v681 = vld [vmem:[%s3 + $0x1e8] sm:$0xff]
        %v682 = vld [vmem:[%s3 + $0x1f0] sm:$0xff]
        %v683 = vld [vmem:[%s3 + $0x1f8] sm:$0xff]
        %v700 = vunpack.c.l.b16 %v604
        %v701 = vunpack.c.l.b16 %v605
        %v702 = vunpack.c.l.b16 %v606
        %v703 = vunpack.c.l.b16 %v607
        %v704 = vunpack.c.l.b16 %v608
        %v705 = vunpack.c.l.b16 %v609
        %v706 = vunpack.c.l.b16 %v610
        %v707 = vunpack.c.l.b16 %v611
        %v708 = vunpack.c.l.b16 %v612
        %v709 = vunpack.c.l.b16 %v613
        %v710 = vunpack.c.l.b16 %v614
        %v711 = vunpack.c.l.b16 %v615
        %v712 = vunpack.c.l.b16 %v616
        %v713 = vunpack.c.l.b16 %v617
        %v714 = vunpack.c.l.b16 %v618
        %v715 = vunpack.c.l.b16 %v619
        %v716 = vrot.slane %v701, 7
        %vm717 = vcmask 1041409
        %v718 = vsel %vm717, %v716, %v700
        %v719 = vrot.slane %v702, 6
        %vm720 = vcmask 1042434
        %v721 = vsel %vm720, %v719, %v718
        %v722 = vrot.slane %v703, 5
        %vm723 = vcmask 1043459
        %v724 = vsel %vm723, %v722, %v721
        %v725 = vrot.slane %v704, 4
        %vm726 = vcmask 1044484
        %v727 = vsel %vm726, %v725, %v724
        %v728 = vrot.slane %v705, 3
        %vm729 = vcmask 1045509
        %v730 = vsel %vm729, %v728, %v727
        %v731 = vrot.slane %v706, 2
        %vm732 = vcmask 1046534
        %v733 = vsel %vm732, %v731, %v730
        %v734 = vrot.slane %v707, 1
        %vm735 = vcmask 1047559
        %v736 = vsel %vm735, %v734, %v733
        %v737 = vrot.slane %v709, 7
        %v738 = vsel %vm717, %v737, %v708
        %v739 = vrot.slane %v710, 6
        %v740 = vsel %vm720, %v739, %v738
        %v741 = vrot.slane %v711, 5
        %v742 = vsel %vm723, %v741, %v740
        %v743 = vrot.slane %v712, 4
        %v744 = vsel %vm726, %v743, %v742
        %v745 = vrot.slane %v713, 3
        %v746 = vsel %vm729, %v745, %v744
        %v747 = vrot.slane %v714, 2
        %v748 = vsel %vm732, %v747, %v746
        %v749 = vrot.slane %v715, 1
        %v750 = vsel %vm735, %v749, %v748
        %v751 = vpack.c.b16 %v750, %v736
        %v817 = vunpack.c.l.b16 %v620
        %v818 = vunpack.c.h.b16 %v620
        %v819 = vunpack.c.l.b16 %v621
        %v820 = vunpack.c.h.b16 %v621
        %v821 = vunpack.c.l.b16 %v622
        %v822 = vunpack.c.h.b16 %v622
        %v823 = vunpack.c.l.b16 %v623
        %v824 = vunpack.c.h.b16 %v623
        %v825 = vunpack.c.l.b16 %v624
        %v826 = vunpack.c.h.b16 %v624
        %v827 = vunpack.c.l.b16 %v625
        %v828 = vunpack.c.h.b16 %v625
        %v829 = vunpack.c.l.b16 %v626
        %v830 = vunpack.c.h.b16 %v626
        %v831 = vunpack.c.l.b16 %v627
        %v832 = vunpack.c.h.b16 %v627
        %v833 = vunpack.c.l.b16 %v628
        %v834 = vunpack.c.h.b16 %v628
        %v835 = vunpack.c.l.b16 %v629
        %v836 = vunpack.c.h.b16 %v629
        %v837 = vunpack.c.l.b16 %v630
        %v838 = vunpack.c.h.b16 %v630
        %v839 = vunpack.c.l.b16 %v631
        %v840 = vunpack.c.h.b16 %v631
        %v841 = vunpack.c.l.b16 %v632
        %v842 = vunpack.c.h.b16 %v632
        %v843 = vunpack.c.l.b16 %v633
        %v844 = vunpack.c.h.b16 %v633
        %v845 = vunpack.c.l.b16 %v634
        %v846 = vunpack.c.h.b16 %v634
        %v847 = vunpack.c.l.b16 %v635
        %v848 = vunpack.c.h.b16 %v635
        %v849 = vunpack.c.l.b16 %v636
        %v850 = vunpack.c.h.b16 %v636
        %v851 = vunpack.c.l.b16 %v637
        %v852 = vunpack.c.h.b16 %v637
        %v853 = vunpack.c.l.b16 %v638
        %v854 = vunpack.c.h.b16 %v638
        %v855 = vunpack.c.l.b16 %v639
        %v856 = vunpack.c.h.b16 %v639
        %v857 = vunpack.c.l.b16 %v640
        %v858 = vunpack.c.h.b16 %v640
        %v859 = vunpack.c.l.b16 %v641
        %v860 = vunpack.c.h.b16 %v641
        %v861 = vunpack.c.l.b16 %v642
        %v862 = vunpack.c.h.b16 %v642
        %v863 = vunpack.c.l.b16 %v643
        %v864 = vunpack.c.h.b16 %v643
        %v865 = vunpack.c.l.b16 %v644
        %v866 = vunpack.c.h.b16 %v644
        %v867 = vunpack.c.l.b16 %v645
        %v868 = vunpack.c.h.b16 %v645
        %v869 = vunpack.c.l.b16 %v646
        %v870 = vunpack.c.h.b16 %v646
        %v871 = vunpack.c.l.b16 %v647
        %v872 = vunpack.c.h.b16 %v647
        %v873 = vunpack.c.l.b16 %v648
        %v874 = vunpack.c.h.b16 %v648
        %v875 = vunpack.c.l.b16 %v649
        %v876 = vunpack.c.h.b16 %v649
        %v877 = vunpack.c.l.b16 %v650
        %v878 = vunpack.c.h.b16 %v650
        %v879 = vunpack.c.l.b16 %v651
        %v880 = vunpack.c.h.b16 %v651
        %v881 = vunpack.c.l.b16 %v652
        %v882 = vunpack.c.h.b16 %v652
        %v883 = vunpack.c.l.b16 %v653
        %v884 = vunpack.c.h.b16 %v653
        %v885 = vunpack.c.l.b16 %v654
        %v886 = vunpack.c.h.b16 %v654
        %v887 = vunpack.c.l.b16 %v655
        %v888 = vunpack.c.h.b16 %v655
        %v889 = vunpack.c.l.b16 %v656
        %v890 = vunpack.c.h.b16 %v656
        %v891 = vunpack.c.l.b16 %v657
        %v892 = vunpack.c.h.b16 %v657
        %v893 = vunpack.c.l.b16 %v658
        %v894 = vunpack.c.h.b16 %v658
        %v895 = vunpack.c.l.b16 %v659
        %v896 = vunpack.c.h.b16 %v659
        %v897 = vunpack.c.l.b16 %v660
        %v898 = vunpack.c.h.b16 %v660
        %v899 = vunpack.c.l.b16 %v661
        %v900 = vunpack.c.h.b16 %v661
        %v901 = vunpack.c.l.b16 %v662
        %v902 = vunpack.c.h.b16 %v662
        %v903 = vunpack.c.l.b16 %v663
        %v904 = vunpack.c.h.b16 %v663
        %v905 = vunpack.c.l.b16 %v664
        %v906 = vunpack.c.h.b16 %v664
        %v907 = vunpack.c.l.b16 %v665
        %v908 = vunpack.c.h.b16 %v665
        %v909 = vunpack.c.l.b16 %v666
        %v910 = vunpack.c.h.b16 %v666
        %v911 = vunpack.c.l.b16 %v667
        %v912 = vunpack.c.h.b16 %v667
        %v913 = vunpack.c.l.b16 %v668
        %v914 = vunpack.c.h.b16 %v668
        %v915 = vunpack.c.l.b16 %v669
        %v916 = vunpack.c.h.b16 %v669
        %v917 = vunpack.c.l.b16 %v670
        %v918 = vunpack.c.h.b16 %v670
        %v919 = vunpack.c.l.b16 %v671
        %v920 = vunpack.c.h.b16 %v671
        %v921 = vunpack.c.l.b16 %v672
        %v922 = vunpack.c.h.b16 %v672
        %v923 = vunpack.c.l.b16 %v673
        %v924 = vunpack.c.h.b16 %v673
        %v925 = vunpack.c.l.b16 %v674
        %v926 = vunpack.c.h.b16 %v674
        %v927 = vunpack.c.l.b16 %v675
        %v928 = vunpack.c.h.b16 %v675
        %v929 = vunpack.c.l.b16 %v676
        %v930 = vunpack.c.h.b16 %v676
        %v931 = vunpack.c.l.b16 %v677
        %v932 = vunpack.c.h.b16 %v677
        %v933 = vunpack.c.l.b16 %v678
        %v934 = vunpack.c.h.b16 %v678
        %v935 = vunpack.c.l.b16 %v679
        %v936 = vunpack.c.h.b16 %v679
        %v937 = vunpack.c.l.b16 %v680
        %v938 = vunpack.c.h.b16 %v680
        %v939 = vunpack.c.l.b16 %v681
        %v940 = vunpack.c.h.b16 %v681
        %v941 = vunpack.c.l.b16 %v682
        %v942 = vunpack.c.h.b16 %v682
        %v943 = vunpack.c.l.b16 %v683
        %v944 = vunpack.c.h.b16 %v683
        %v945 = vpack.c.b16 %v825, %v817
        %v946 = vpack.c.b16 %v826, %v818
        %v947 = vpack.c.b16 %v827, %v819
        %v948 = vpack.c.b16 %v828, %v820
        %v949 = vpack.c.b16 %v829, %v821
        %v950 = vpack.c.b16 %v830, %v822
        %v951 = vpack.c.b16 %v831, %v823
        %v952 = vpack.c.b16 %v832, %v824
        %v953 = vpack.c.b16 %v841, %v833
        %v954 = vpack.c.b16 %v842, %v834
        %v955 = vpack.c.b16 %v843, %v835
        %v956 = vpack.c.b16 %v844, %v836
        %v957 = vpack.c.b16 %v845, %v837
        %v958 = vpack.c.b16 %v846, %v838
        %v959 = vpack.c.b16 %v847, %v839
        %v960 = vpack.c.b16 %v848, %v840
        %v961 = vpack.c.b16 %v857, %v849
        %v962 = vpack.c.b16 %v858, %v850
        %v963 = vpack.c.b16 %v859, %v851
        %v964 = vpack.c.b16 %v860, %v852
        %v965 = vpack.c.b16 %v861, %v853
        %v966 = vpack.c.b16 %v862, %v854
        %v967 = vpack.c.b16 %v863, %v855
        %v968 = vpack.c.b16 %v864, %v856
        %v969 = vpack.c.b16 %v873, %v865
        %v970 = vpack.c.b16 %v874, %v866
        %v971 = vpack.c.b16 %v875, %v867
        %v972 = vpack.c.b16 %v876, %v868
        %v973 = vpack.c.b16 %v877, %v869
        %v974 = vpack.c.b16 %v878, %v870
        %v975 = vpack.c.b16 %v879, %v871
        %v976 = vpack.c.b16 %v880, %v872
        %v977 = vpack.c.b16 %v889, %v881
        %v978 = vpack.c.b16 %v890, %v882
        %v979 = vpack.c.b16 %v891, %v883
        %v980 = vpack.c.b16 %v892, %v884
        %v981 = vpack.c.b16 %v893, %v885
        %v982 = vpack.c.b16 %v894, %v886
        %v983 = vpack.c.b16 %v895, %v887
        %v984 = vpack.c.b16 %v896, %v888
        %v985 = vpack.c.b16 %v905, %v897
        %v986 = vpack.c.b16 %v906, %v898
        %v987 = vpack.c.b16 %v907, %v899
        %v988 = vpack.c.b16 %v908, %v900
        %v989 = vpack.c.b16 %v909, %v901
        %v990 = vpack.c.b16 %v910, %v902
        %v991 = vpack.c.b16 %v911, %v903
        %v992 = vpack.c.b16 %v912, %v904
        %v993 = vpack.c.b16 %v921, %v913
        %v994 = vpack.c.b16 %v922, %v914
        %v995 = vpack.c.b16 %v923, %v915
        %v996 = vpack.c.b16 %v924, %v916
        %v997 = vpack.c.b16 %v925, %v917
        %v998 = vpack.c.b16 %v926, %v918
        %v999 = vpack.c.b16 %v927, %v919
        %v1000 = vpack.c.b16 %v928, %v920
        %v1001 = vpack.c.b16 %v937, %v929
        %v1002 = vpack.c.b16 %v938, %v930
        %v1003 = vpack.c.b16 %v939, %v931
        %v1004 = vpack.c.b16 %v940, %v932
        %v1005 = vpack.c.b16 %v941, %v933
        %v1006 = vpack.c.b16 %v942, %v934
        %v1007 = vpack.c.b16 %v943, %v935
        %v1008 = vpack.c.b16 %v944, %v936
        %1073 = vmatprep.subr.bf16.mxu0 %v946
        %1074 = vmatpush1.bf16.msra.mxu0 %v945
        %1075 = vmatprep.subr.bf16.mxu0 %v954
        %1076 = vmatpush1.bf16.msra.mxu0 %v953
        %1077 = vmatprep.subr.bf16.mxu0 %v962
        %1078 = vmatpush1.bf16.msra.mxu0 %v961
        %1079 = vmatprep.subr.bf16.mxu0 %v970
        %1080 = vmatpush1.bf16.msra.mxu0 %v969
        %1081 = vmatprep.subr.bf16.mxu0 %v978
        %1082 = vmatpush1.bf16.msra.mxu0 %v977
        %1083 = vmatprep.subr.bf16.mxu0 %v986
        %1084 = vmatpush1.bf16.msra.mxu0 %v985
        %1085 = vmatprep.subr.bf16.mxu0 %v994
        %1086 = vmatpush1.bf16.msra.mxu0 %v993
        %1087 = vmatprep.subr.bf16.mxu0 %v1002
        %1088 = vmatpush1.bf16.msra.mxu0 %v1001
        %1089 = vmatprep.subr.bf16.mxu0 0
        %1090 = vmatpush1.bf16.msra.mxu0 0
        %1091 = vmatprep.subr.bf16.mxu0 0
        %1092 = vmatpush1.bf16.msra.mxu0 0
        %1093 = vmatprep.subr.bf16.mxu0 0
        %1094 = vmatpush1.bf16.msra.mxu0 0
        %1095 = vmatprep.subr.bf16.mxu0 0
        %1096 = vmatpush1.bf16.msra.mxu0 0
        %1097 = vmatprep.subr.bf16.mxu0 0
        %1098 = vmatpush1.bf16.msra.mxu0 0
        %1099 = vmatprep.subr.bf16.mxu0 0
        %1100 = vmatpush1.bf16.msra.mxu0 0
        %1101 = vmatprep.subr.bf16.mxu0 0
        %1102 = vmatpush1.bf16.msra.mxu0 0
        %1103 = vmatprep.subr.bf16.mxu0 0
        %1104 = vmatpush1.bf16.msra.mxu0 0
        %1105 = vmatprep.mubr.bf16.mxu0 0
        %1106 = vmatmul.mubr.bf16.gmra.mrb[0].mxu0 %v751
        %v1107 = vpop.f32.mrb[0].mxu0
        %v1108 = vadd.f32 0.0, %v1107
        %v1109 = vpop.f32.mrb[0].mxu0
        %v1110 = vadd.f32 0.0, %v1109
        %v1111 = vpop.f32.mrb[0].mxu0
        %v1112 = vadd.f32 0.0, %v1111
        %v1113 = vpop.f32.mrb[0].mxu0
        %v1114 = vadd.f32 0.0, %v1113
        %1115 = vdwg.mxu0
        %1116 = vmatprep.subr.bf16.mxu0 %v948
        %1117 = vmatpush1.bf16.msra.mxu0 %v947
        %1118 = vmatprep.subr.bf16.mxu0 %v956
        %1119 = vmatpush1.bf16.msra.mxu0 %v955
        %1120 = vmatprep.subr.bf16.mxu0 %v964
        %1121 = vmatpush1.bf16.msra.mxu0 %v963
        %1122 = vmatprep.subr.bf16.mxu0 %v972
        %1123 = vmatpush1.bf16.msra.mxu0 %v971
        %1124 = vmatprep.subr.bf16.mxu0 %v980
        %1125 = vmatpush1.bf16.msra.mxu0 %v979
        %1126 = vmatprep.subr.bf16.mxu0 %v988
        %1127 = vmatpush1.bf16.msra.mxu0 %v987
        %1128 = vmatprep.subr.bf16.mxu0 %v996
        %1129 = vmatpush1.bf16.msra.mxu0 %v995
        %1130 = vmatprep.subr.bf16.mxu0 %v1004
        %1131 = vmatpush1.bf16.msra.mxu0 %v1003
        %1132 = vmatprep.subr.bf16.mxu0 0
        %1133 = vmatpush1.bf16.msra.mxu0 0
        %1134 = vmatprep.subr.bf16.mxu0 0
        %1135 = vmatpush1.bf16.msra.mxu0 0
        %1136 = vmatprep.subr.bf16.mxu0 0
        %1137 = vmatpush1.bf16.msra.mxu0 0
        %1138 = vmatprep.subr.bf16.mxu0 0
        %1139 = vmatpush1.bf16.msra.mxu0 0
        %1140 = vmatprep.subr.bf16.mxu0 0
        %1141 = vmatpush1.bf16.msra.mxu0 0
        %1142 = vmatprep.subr.bf16.mxu0 0
        %1143 = vmatpush1.bf16.msra.mxu0 0
        %1144 = vmatprep.subr.bf16.mxu0 0
        %1145 = vmatpush1.bf16.msra.mxu0 0
        %1146 = vmatprep.subr.bf16.mxu0 0
        %1147 = vmatpush1.bf16.msra.mxu0 0
        %1148 = vmatprep.mubr.bf16.mxu0 0
        %1149 = vmatmul.mubr.bf16.gmra.mrb[0].mxu0 %v751
        %v1150 = vpop.f32.mrb[0].mxu0
        %v1151 = vadd.f32 0.0, %v1150
        %v1152 = vpop.f32.mrb[0].mxu0
        %v1153 = vadd.f32 0.0, %v1152
        %v1154 = vpop.f32.mrb[0].mxu0
        %v1155 = vadd.f32 0.0, %v1154
        %v1156 = vpop.f32.mrb[0].mxu0
        %v1157 = vadd.f32 0.0, %v1156
        %1158 = vdwg.mxu0
        %1159 = vmatprep.subr.bf16.mxu0 %v950
        %1160 = vmatpush1.bf16.msra.mxu0 %v949
        %1161 = vmatprep.subr.bf16.mxu0 %v958
        %1162 = vmatpush1.bf16.msra.mxu0 %v957
        %1163 = vmatprep.subr.bf16.mxu0 %v966
        %1164 = vmatpush1.bf16.msra.mxu0 %v965
        %1165 = vmatprep.subr.bf16.mxu0 %v974
        %1166 = vmatpush1.bf16.msra.mxu0 %v973
        %1167 = vmatprep.subr.bf16.mxu0 %v982
        %1168 = vmatpush1.bf16.msra.mxu0 %v981
        %1169 = vmatprep.subr.bf16.mxu0 %v990
        %1170 = vmatpush1.bf16.msra.mxu0 %v989
        %1171 = vmatprep.subr.bf16.mxu0 %v998
        %1172 = vmatpush1.bf16.msra.mxu0 %v997
        %1173 = vmatprep.subr.bf16.mxu0 %v1006
        %1174 = vmatpush1.bf16.msra.mxu0 %v1005
        %1175 = vmatprep.subr.bf16.mxu0 0
        %1176 = vmatpush1.bf16.msra.mxu0 0
        %1177 = vmatprep.subr.bf16.mxu0 0
        %1178 = vmatpush1.bf16.msra.mxu0 0
        %1179 = vmatprep.subr.bf16.mxu0 0
        %1180 = vmatpush1.bf16.msra.mxu0 0
        %1181 = vmatprep.subr.bf16.mxu0 0
        %1182 = vmatpush1.bf16.msra.mxu0 0
        %1183 = vmatprep.subr.bf16.mxu0 0
        %1184 = vmatpush1.bf16.msra.mxu0 0
        %1185 = vmatprep.subr.bf16.mxu0 0
        %1186 = vmatpush1.bf16.msra.mxu0 0
        %1187 = vmatprep.subr.bf16.mxu0 0
        %1188 = vmatpush1.bf16.msra.mxu0 0
        %1189 = vmatprep.subr.bf16.mxu0 0
        %1190 = vmatpush1.bf16.msra.mxu0 0
        %1191 = vmatprep.mubr.bf16.mxu0 0
        %1192 = vmatmul.mubr.bf16.gmra.mrb[0].mxu0 %v751
        %v1193 = vpop.f32.mrb[0].mxu0
        %v1194 = vadd.f32 0.0, %v1193
        %v1195 = vpop.f32.mrb[0].mxu0
        %v1196 = vadd.f32 0.0, %v1195
        %v1197 = vpop.f32.mrb[0].mxu0
        %v1198 = vadd.f32 0.0, %v1197
        %v1199 = vpop.f32.mrb[0].mxu0
        %v1200 = vadd.f32 0.0, %v1199
        %1201 = vdwg.mxu0
        %1202 = vmatprep.subr.bf16.mxu0 %v952
        %1203 = vmatpush1.bf16.msra.mxu0 %v951
        %1204 = vmatprep.subr.bf16.mxu0 %v960
        %1205 = vmatpush1.bf16.msra.mxu0 %v959
        %1206 = vmatprep.subr.bf16.mxu0 %v968
        %1207 = vmatpush1.bf16.msra.mxu0 %v967
        %1208 = vmatprep.subr.bf16.mxu0 %v976
        %1209 = vmatpush1.bf16.msra.mxu0 %v975
        %1210 = vmatprep.subr.bf16.mxu0 %v984
        %1211 = vmatpush1.bf16.msra.mxu0 %v983
        %1212 = vmatprep.subr.bf16.mxu0 %v992
        %1213 = vmatpush1.bf16.msra.mxu0 %v991
        %1214 = vmatprep.subr.bf16.mxu0 %v1000
        %1215 = vmatpush1.bf16.msra.mxu0 %v999
        %1216 = vmatprep.subr.bf16.mxu0 %v1008
        %1217 = vmatpush1.bf16.msra.mxu0 %v1007
        %1218 = vmatprep.subr.bf16.mxu0 0
        %1219 = vmatpush1.bf16.msra.mxu0 0
        %1220 = vmatprep.subr.bf16.mxu0 0
        %1221 = vmatpush1.bf16.msra.mxu0 0
        %1222 = vmatprep.subr.bf16.mxu0 0
        %1223 = vmatpush1.bf16.msra.mxu0 0
        %1224 = vmatprep.subr.bf16.mxu0 0
        %1225 = vmatpush1.bf16.msra.mxu0 0
        %1226 = vmatprep.subr.bf16.mxu0 0
        %1227 = vmatpush1.bf16.msra.mxu0 0
        %1228 = vmatprep.subr.bf16.mxu0 0
        %1229 = vmatpush1.bf16.msra.mxu0 0
        %1230 = vmatprep.subr.bf16.mxu0 0
        %1231 = vmatpush1.bf16.msra.mxu0 0
        %1232 = vmatprep.subr.bf16.mxu0 0
        %1233 = vmatpush1.bf16.msra.mxu0 0
        %1234 = vmatprep.mubr.bf16.mxu0 0
        %1235 = vmatmul.mubr.bf16.gmra.mrb[0].mxu0 %v751
        %v1236 = vpop.f32.mrb[0].mxu0
        %v1237 = vadd.f32 0.0, %v1236
        %v1238 = vpop.f32.mrb[0].mxu0
        %v1239 = vadd.f32 0.0, %v1238
        %v1240 = vpop.f32.mrb[0].mxu0
        %v1241 = vadd.f32 0.0, %v1240
        %v1242 = vpop.f32.mrb[0].mxu0
        %v1243 = vadd.f32 0.0, %v1242
        %1244 = vdwg.mxu0
        %v1245 = vmax.f32 %v1108, %v1112
        %v1246 = vrot.slane %v1245, 4
        %v1247 = vmax.f32 %v1245, %v1246
        %v1248 = vrot.slane %v1247, 2
        %v1249 = vmax.f32 %v1247, %v1248
        %v1250 = vrot.slane %v1249, 1
        %v1251 = vmax.f32 %v1249, %v1250
        %v1252 = vmax.f32 %v1110, %v1114
        %v1253 = vrot.slane %v1252, 4
        %v1254 = vmax.f32 %v1252, %v1253
        %v1255 = vrot.slane %v1254, 2
        %v1256 = vmax.f32 %v1254, %v1255
        %v1257 = vrot.slane %v1256, 1
        %v1258 = vmax.f32 %v1256, %v1257
        %v1259 = vmax.f32 %v1151, %v1155
        %v1260 = vrot.slane %v1259, 4
        %v1261 = vmax.f32 %v1259, %v1260
        %v1262 = vrot.slane %v1261, 2
        %v1263 = vmax.f32 %v1261, %v1262
        %v1264 = vrot.slane %v1263, 1
        %v1265 = vmax.f32 %v1263, %v1264
        %v1266 = vmax.f32 %v1153, %v1157
        %v1267 = vrot.slane %v1266, 4
        %v1268 = vmax.f32 %v1266, %v1267
        %v1269 = vrot.slane %v1268, 2
        %v1270 = vmax.f32 %v1268, %v1269
        %v1271 = vrot.slane %v1270, 1
        %v1272 = vmax.f32 %v1270, %v1271
        %v1273 = vmax.f32 %v1194, %v1198
        %v1274 = vrot.slane %v1273, 4
        %v1275 = vmax.f32 %v1273, %v1274
        %v1276 = vrot.slane %v1275, 2
        %v1277 = vmax.f32 %v1275, %v1276
        %v1278 = vrot.slane %v1277, 1
        %v1279 = vmax.f32 %v1277, %v1278
        %v1280 = vmax.f32 %v1196, %v1200
        %v1281 = vrot.slane %v1280, 4
        %v1282 = vmax.f32 %v1280, %v1281
        %v1283 = vrot.slane %v1282, 2
        %v1284 = vmax.f32 %v1282, %v1283
        %v1285 = vrot.slane %v1284, 1
        %v1286 = vmax.f32 %v1284, %v1285
        %v1287 = vmax.f32 %v1237, %v1241
        %v1288 = vrot.slane %v1287, 4
        %v1289 = vmax.f32 %v1287, %v1288
        %v1290 = vrot.slane %v1289, 2
        %v1291 = vmax.f32 %v1289, %v1290
        %v1292 = vrot.slane %v1291, 1
        %v1293 = vmax.f32 %v1291, %v1292
        %v1294 = vmax.f32 %v1239, %v1243
        %v1295 = vrot.slane %v1294, 4
        %v1296 = vmax.f32 %v1294, %v1295
        %v1297 = vrot.slane %v1296, 2
        %v1298 = vmax.f32 %v1296, %v1297
        %v1299 = vrot.slane %v1298, 1
        %v1300 = vmax.f32 %v1298, %v1299
        %v1301 = vld [vmem:[%s236] sm:$0xff]
        %v1310 = vcombine.low %v1251, %v1258
        %v1311 = vcombine.low %v1265, %v1272
        %v1312 = vcombine.low %v1279, %v1286
        %v1313 = vcombine.low %v1293, %v1300
        %v1315 = vunpack.c.l.s4 1966171168
        %v1316 = vunpack.c.0.s8 %v1315
        %v1317 = vlaneseq
        %v1318 = vshrl.u32 %v1317, 7
        %v1319 = vsub.s32 %v1316, %v1318
        %v1320 = vrot.slane %v1310, %v1319
        %v1322 = vunpack.c.l.s4 1966171168
        %v1323 = vunpack.c.0.s8 %v1322
        %v1324 = vlaneseq
        %v1325 = vshrl.u32 %v1324, 7
        %v1326 = vsub.s32 %v1323, %v1325
        %v1327 = vrot.slane %v1311, %v1326
        %v1329 = vunpack.c.l.s4 1966171168
        %v1330 = vunpack.c.0.s8 %v1329
        %v1331 = vlaneseq
        %v1332 = vshrl.u32 %v1331, 7
        %v1333 = vsub.s32 %v1330, %v1332
        %v1334 = vrot.slane %v1312, %v1333
        %v1336 = vunpack.c.l.s4 1966171168
        %v1337 = vunpack.c.0.s8 %v1336
        %v1338 = vlaneseq
        %v1339 = vshrl.u32 %v1338, 7
        %v1340 = vsub.s32 %v1337, %v1339
        %v1341 = vrot.slane %v1313, %v1340
        %v1342 = vcombine.low %v1320, %v1327
        %v1343 = vcombine.low %v1334, %v1341
        %v1345 = vunpack.c.l.s4 1966171168
        %v1346 = vunpack.c.0.s8 %v1345
        %v1347 = vlaneseq
        %v1348 = vshrl.u32 %v1347, 7
        %v1349 = vsub.s32 %v1346, %v1348
        %v1350 = vrot.slane %v1342, %v1349
        %v1352 = vunpack.c.l.s4 1966171168
        %v1353 = vunpack.c.0.s8 %v1352
        %v1354 = vlaneseq
        %v1355 = vshrl.u32 %v1354, 7
        %v1356 = vsub.s32 %v1353, %v1355
        %v1357 = vrot.slane %v1343, %v1356
        %v1358 = vcombine.low %v1350, %v1357
        %v1360 = vmax.f32 %v1301, %v1358
        %1361 = vst [vmem:[%s236] sm:$0xff] %v1360
        %p1362 = scmp.lt.s32.totalorder %s20, 1
        %s1363 = scalar_select %p1362, %s20, 1
        %s1364 = smul.addr %s1363, 8
        %s1365 = scalar_lea.vmem %s4, %s1364
        // Predicated region
        $region45: #{transform_net_forward.1} parent=35 // pred_check
          %p1366 = pneg %p137
        $region46: #{transform_net_forward.1} parent=35 // pred_check_branch
          %1368 = sbr.rel (%p1366) target = $region48
        $region47: #{transform_net_forward.1} parent=35 // pred_region
          _
        $region48: #{transform_net_forward.1} parent=35 // pred_fallthru
          _
      $region36: #{transform_net_forward.1} parent=5 // pred_fallthru
        _
      %p1369 = scmp.le.s32.totalorder 2, %s11
      // Predicated region
      $region49: #{transform_net_forward.1} parent=5 // pred_check
        %p1370 = pneg %p1369
      $region50: #{transform_net_forward.1} parent=5 // pred_check_branch
        %1372 = sbr.rel (%p1370) target = $region52
      $region51: #{transform_net_forward.1} parent=5 // pred_region
        %s1373 = ssub.s32 %s11, 2
        // Predicated region
        $region53: #{transform_net_forward.1} parent=51 // pred_check
          %p1374 = pneg %p143
        $region54: #{transform_net_forward.1} parent=51 // pred_check_branch
          %1376 = sbr.rel (%p1374) target = $region56
        $region55: #{transform_net_forward.1} parent=51 // pred_region
          %p1377 = scmp.lt.s32.totalorder %s22, 1
          %s1378 = scalar_select %p1377, %s22, 1
          %s1379 = smul.addr %s1378, 8
          %s1380 = scalar_lea.vmem %s4, %s1379
        $region56: #{transform_net_forward.1} parent=51 // pred_fallthru
          _
      $region52: #{transform_net_forward.1} parent=5 // pred_fallthru
        _
    $region6: #{transform_net_forward.1} parent=1 // loop_footer
      %s15 = sadd.s32 1, %s11
    $region7: #{transform_net_forward.1} parent=1 // loop_footer_branch
      %10 = sbr.rel target = $region3
    $region8: #{transform_net_forward.1} parent=1 // loop_exit
      _
    %1381 = vsyncpa [#allocation3], 1
    %s1382 = scalar_lea.sflag [#allocation3], 1
    %1383 = vsyncpa %s1382, 1

</llo_original>
